<compile_context>
chip_gen: v6e
topology: v6e:2x2x1
jax: 0.10.0
libtpu: 0.0.40
codegen_flags: <defaults>
</compile_context>

<pallas_src>
import jax
import jax.numpy as jnp
from jax.experimental import pallas as pl
from jax.experimental.pallas import tpu as pltpu

IN_DIM = 196
HID_DIM = 128
LATENT = 8
OUT_DIM = 2 * LATENT  # 16


def _round_up(n, m):
    return (n + m - 1) // m * m


def _cdiv(a, b):
    return -(-a // b)


def encoder_kernel(x_ref, w1_ref, b1_ref, w2_ref, b2_ref, y_ref):
    # fc1: cast x to bf16 in VMEM (hidden under DMA), f32 accumulation on MXU
    x = x_ref[...].astype(jnp.bfloat16)                       # (TB, 196)
    h = jnp.dot(x, w1_ref[...],
                preferred_element_type=jnp.float32)           # (TB, 128) f32
    h = jnp.tanh(h + b1_ref[...])                             # (1,128) broadcast
    # fc2: bf16 operands, f32 accumulation; true 16-wide output (no zero cols)
    y = jnp.dot(h.astype(w2_ref.dtype), w2_ref[...],
                preferred_element_type=jnp.float32)           # (TB, 16) f32
    y_ref[...] = y + b2_ref[...]


def encoder_forward(x, w1, b1, w2, b2, *, block_b=4096):
    """x: (B, 196) f32; w1: (196,128); b1: (1,128); w2: (128,16); b2: (1,16)."""
    B = x.shape[0]

    # Batch tiling: multiple of 8 sublanes, <= block_b, and >= 2 blocks when
    # B >= 16 so both v7x TensorCores get work on the ("parallel",) axis.
    block_b = max(8, _round_up(block_b, 8))
    B8 = _round_up(B, 8)
    n_blocks = max(1, _cdiv(B8, block_b))
    if n_blocks == 1 and B8 >= 16:
        n_blocks = 2
    TB = _round_up(_cdiv(B8, n_blocks), 8)
    Bp = _round_up(B8, TB)

    # Only padding left is a handful of batch rows (<= TB-ish, typically <= 8).
    xp = jnp.pad(x, ((0, Bp - B), (0, 0)))                    # f32, K = 196
    w1b = w1.astype(jnp.bfloat16)                             # (196, 128)
    w2b = w2.astype(jnp.bfloat16)                             # (128, 16)
    b1f = b1.astype(jnp.float32)                              # (1, 128)
    b2f = b2.astype(jnp.float32)                              # (1, 16)

    y_pad = pl.pallas_call(
        encoder_kernel,
        out_shape=jax.ShapeDtypeStruct((Bp, OUT_DIM), jnp.float32),
        grid_spec=pltpu.PrefetchScalarGridSpec(
            num_scalar_prefetch=0,
            grid=(Bp // TB,),
            in_specs=[
                pl.BlockSpec((TB, IN_DIM), lambda i: (i, 0)),       # x tile
                pl.BlockSpec((IN_DIM, HID_DIM), lambda i: (0, 0)),  # w1 resident
                pl.BlockSpec((1, HID_DIM), lambda i: (0, 0)),       # b1 resident
                pl.BlockSpec((HID_DIM, OUT_DIM), lambda i: (0, 0)),  # w2 resident
                pl.BlockSpec((1, OUT_DIM), lambda i: (0, 0)),        # b2 resident
            ],
            out_specs=pl.BlockSpec((TB, OUT_DIM), lambda i: (i, 0)),
        ),
        compiler_params=pltpu.CompilerParams(
            dimension_semantics=("parallel",),
            vmem_limit_bytes=32 * 1024 * 1024,
        ),
    )(xp, w1b, b1f, w2b, b2f)

    y = y_pad[:B]                       # drop batch padding (free in XLA)
    return y[:, :LATENT], y[:, LATENT:]


def init_params(key):
    # Deterministic init mimicking PyTorch nn.Linear default:
    # U(-1/sqrt(fan_in), 1/sqrt(fan_in)) for weights and biases.
    k1, k2, k3, k4 = jax.random.split(key, 4)
    bound1 = 1.0 / jnp.sqrt(IN_DIM)
    bound2 = 1.0 / jnp.sqrt(HID_DIM)
    w1 = jax.random.uniform(k1, (IN_DIM, HID_DIM), jnp.float32, -bound1, bound1)
    b1 = jax.random.uniform(k2, (1, HID_DIM), jnp.float32, -bound1, bound1)
    w2 = jax.random.uniform(k3, (HID_DIM, OUT_DIM), jnp.float32, -bound2, bound2)
    b2 = jax.random.uniform(k4, (1, OUT_DIM), jnp.float32, -bound2, bound2)
    return w1, b1, w2, b2


if __name__ == "__main__":
    key = jax.random.PRNGKey(0)
    k_x, k_p = jax.random.split(key)

    B = 8
    x = jax.random.normal(k_x, (B, IN_DIM), jnp.float32)
    w1, b1, w2, b2 = init_params(k_p)

    mu, logvar = encoder_forward(x, w1, b1, w2, b2)
    jax.block_until_ready((mu, logvar))

    # Reference check in plain JAX f32 (same math as the PyTorch forward).
    # bf16 matmul operands with f32 accumulation -> loosened tolerance.
    h_ref = jnp.tanh(x @ w1 + b1)
    y_ref = h_ref @ w2 + b2
    mu_ref, logvar_ref = y_ref[:, :LATENT], y_ref[:, LATENT:]
    assert mu.shape == (B, LATENT) and logvar.shape == (B, LATENT)
    assert jnp.allclose(mu, mu_ref, atol=3e-2, rtol=3e-2)
    assert jnp.allclose(logvar, logvar_ref, atol=3e-2, rtol=3e-2)

    print("KERNEL_OK")
</pallas_src>

<mosaic_0001>
module attributes {stable_mosaic.version = 11 : i64} {
  func.func @encoder_kernel(%arg0: i32, %arg1: memref<8x196xf32, #tpu.memory_space<vmem>>, %arg2: memref<196x128xbf16, #tpu.memory_space<vmem>>, %arg3: memref<1x128xf32, #tpu.memory_space<vmem>>, %arg4: memref<128x16xbf16, #tpu.memory_space<vmem>>, %arg5: memref<1x16xf32, #tpu.memory_space<vmem>>, %arg6: memref<8x16xf32, #tpu.memory_space<vmem>>) attributes {dimension_semantics = [#tpu.dimension_semantics<parallel>], iteration_bounds = array<i64: 1>, scalar_prefetch = 0 : i64, scratch_operands = 0 : i64, tpu.core_type = #tpu.core_type<tc>, window_params = [{transform_indices = @transform_0, window_bounds = array<i64: 8, 196>}, {pipeline_mode = #tpu.pipeline_mode<synchronous>, transform_indices = @transform_1, window_bounds = array<i64: 196, 128>}, {pipeline_mode = #tpu.pipeline_mode<synchronous>, transform_indices = @transform_2, window_bounds = array<i64: 1, 128>}, {pipeline_mode = #tpu.pipeline_mode<synchronous>, transform_indices = @transform_3, window_bounds = array<i64: 128, 16>}, {pipeline_mode = #tpu.pipeline_mode<synchronous>, transform_indices = @transform_4, window_bounds = array<i64: 1, 16>}, {transform_indices = @transform_5, window_bounds = array<i64: 8, 16>}]} {
    %c0 = arith.constant 0 : index
    %c0_0 = arith.constant 0 : index
    %0 = vector.load %arg1[%c0, %c0_0] : memref<8x196xf32, #tpu.memory_space<vmem>>, vector<8x196xf32>
    %1 = arith.truncf %0 : vector<8x196xf32> to vector<8x196xbf16>
    %c0_1 = arith.constant 0 : index
    %c0_2 = arith.constant 0 : index
    %2 = vector.load %arg2[%c0_1, %c0_2] : memref<196x128xbf16, #tpu.memory_space<vmem>>, vector<196x128xbf16>
    %cst = arith.constant dense<0.000000e+00> : vector<8x128xf32>
    %3 = tpu.matmul %1, %2, %cst {dimension_numbers = #tpu.dot_dimension_numbers<[1], [0], [0], [1], [0, 0, 1, 1], [], []>} : vector<8x196xbf16>, vector<196x128xbf16>, vector<8x128xf32> -> vector<8x128xf32>
    %c0_3 = arith.constant 0 : index
    %c0_4 = arith.constant 0 : index
    %4 = vector.load %arg3[%c0_3, %c0_4] : memref<1x128xf32, #tpu.memory_space<vmem>>, vector<1x128xf32>
    %5 = vector.broadcast %4 : vector<1x128xf32> to vector<8x128xf32>
    %6 = arith.addf %3, %5 : vector<8x128xf32>
    %7 = math.tanh %6 : vector<8x128xf32>
    %8 = arith.truncf %7 : vector<8x128xf32> to vector<8x128xbf16>
    %c0_5 = arith.constant 0 : index
    %c0_6 = arith.constant 0 : index
    %9 = vector.load %arg4[%c0_5, %c0_6] : memref<128x16xbf16, #tpu.memory_space<vmem>>, vector<128x16xbf16>
    %cst_7 = arith.constant dense<0.000000e+00> : vector<8x16xf32>
    %10 = tpu.matmul %8, %9, %cst_7 {dimension_numbers = #tpu.dot_dimension_numbers<[1], [0], [0], [1], [0, 0, 1, 1], [], []>} : vector<8x128xbf16>, vector<128x16xbf16>, vector<8x16xf32> -> vector<8x16xf32>
    %c0_8 = arith.constant 0 : index
    %c0_9 = arith.constant 0 : index
    %11 = vector.load %arg5[%c0_8, %c0_9] : memref<1x16xf32, #tpu.memory_space<vmem>>, vector<1x16xf32>
    %12 = vector.broadcast %11 : vector<1x16xf32> to vector<8x16xf32>
    %13 = arith.addf %10, %12 : vector<8x16xf32>
    %c0_10 = arith.constant 0 : index
    %c0_11 = arith.constant 0 : index
    %14 = vector.load %arg6[%c0_10, %c0_11] : memref<8x16xf32, #tpu.memory_space<vmem>>, vector<8x16xf32>
    tpu.vector_store %arg6[%c0_10, %c0_11], %13 {strides = array<i32>} : memref<8x16xf32, #tpu.memory_space<vmem>>, vector<8x16xf32>,
    return
  }
  func.func @transform_0(%arg0: i32) -> (i32, i32) {
    %c0_i32 = arith.constant 0 : i32
    %c0_i32_0 = arith.constant 0 : i32
    return %arg0, %c0_i32 : i32, i32
  }
  func.func @transform_1(%arg0: i32) -> (i32, i32) {
    %c0_i32 = arith.constant 0 : i32
    %c0_i32_0 = arith.constant 0 : i32
    %c0_i32_1 = arith.constant 0 : i32
    return %c0_i32, %c0_i32_0 : i32, i32
  }
  func.func @transform_2(%arg0: i32) -> (i32, i32) {
    %c0_i32 = arith.constant 0 : i32
    %c0_i32_0 = arith.constant 0 : i32
    %c0_i32_1 = arith.constant 0 : i32
    return %c0_i32, %c0_i32_0 : i32, i32
  }
  func.func @transform_3(%arg0: i32) -> (i32, i32) {
    %c0_i32 = arith.constant 0 : i32
    %c0_i32_0 = arith.constant 0 : i32
    %c0_i32_1 = arith.constant 0 : i32
    return %c0_i32, %c0_i32_0 : i32, i32
  }
  func.func @transform_4(%arg0: i32) -> (i32, i32) {
    %c0_i32 = arith.constant 0 : i32
    %c0_i32_0 = arith.constant 0 : i32
    %c0_i32_1 = arith.constant 0 : i32
    return %c0_i32, %c0_i32_0 : i32, i32
  }
  func.func @transform_5(%arg0: i32) -> (i32, i32) {
    %c0_i32 = arith.constant 0 : i32
    %c0_i32_0 = arith.constant 0 : i32
    return %arg0, %c0_i32 : i32, i32
  }
}

</mosaic_0001>

<llo_original>
// kernel: tpu_custom_call.1
$region0: #{tpu_custom_call.1}
  #allocation0 [shape = 'u32[]', space=smem, size = 0x4, offset = 0x4, fixed_abs, tag = 'smem constant byte address 0x4 - core index']
  #allocation1 [shape = 'u32[144,128]{1,0:T(1,128)}', space=vmem, size = 0x12000, scoped, tag = 'internal scratch']
  %s0 = inlined_call_operand.vmem [shape: f32[8,196], index: 0, kind: input, shape index: {}]
  %s1 = inlined_call_operand.hbm [shape: bf16[196,128], index: 1, kind: input, shape index: {}]
  %s2 = inlined_call_operand.vmem [shape: f32[1,128], index: 2, kind: input, shape index: {}]
  %s3 = inlined_call_operand.vmem [shape: bf16[128,16], index: 3, kind: input, shape index: {}]
  %s4 = inlined_call_operand.vmem [shape: f32[1,16], index: 4, kind: input, shape index: {}]
  %s5 = inlined_call_operand.hbm [shape: f32[8,16], index: 5, kind: output, shape index: {}]
  %s6 = sld [smem:[#allocation0]]
  $region34: #{tpu_custom_call.1} parent=0
    _
  %s8 = ssub.s32 1, %s6
  %s9 = scalar_select 0, %s8, %s6
  $region1: #{tpu_custom_call.1} parent=0
    #allocation2 [shape = 'u8[51200]{0}', space=vmem, size = 0xc800, scoped, tag = 'input window, operand 1, single buffered']
    #allocation3 [shape = 's32[1]{0}', space=sflag, size = 0x4, scoped, tag = 'scoped memory for tpu_custom_call.1']
    #allocation4 [shape = 's32[1]{0}', space=sflag, size = 0x4, scoped, tag = 'scoped memory for tpu_custom_call.1']
    #allocation5 [shape = 'u8[4096]{0}', space=vmem, size = 0x1000, scoped, tag = 'output window, operand 0, single buffered']
    %10 = vsyncpa [#allocation3], 0
    %11 = vsyncpa [#allocation4], 0
    // Predicated region
    $region2: #{tpu_custom_call.1} parent=1 // pred_check
      _
    $region3: #{tpu_custom_call.1} parent=1 // pred_check_branch
      %13 = sbr.rel (0) target = $region5
    $region4: #{tpu_custom_call.1} parent=1 // pred_region
      _
    $region5: #{tpu_custom_call.1} parent=1 // pred_fallthru
      _
    // Predicated region
    $region6: #{tpu_custom_call.1} parent=1 // pred_check
      _
    $region7: #{tpu_custom_call.1} parent=1 // pred_check_branch
      %15 = sbr.rel (0) target = $region9
    $region8: #{tpu_custom_call.1} parent=1 // pred_region
      %s17 = ssub.s32 1600, 1600
      %18 = vsyncadd [#allocation3], %s17
      %s19 = sshll.u32 [#allocation2], 4
      %s20 = int_to_ptr.vmem [resolvable:$true] %s19
      %25 = dma.hbm_to_vmem [thread:$0]  %s1, 1600, %s20, [#allocation3], 64, 64, 4
    $region9: #{tpu_custom_call.1} parent=1 // pred_fallthru
      _
    // Predicated region
    $region10: #{tpu_custom_call.1} parent=1 // pred_check
      _
    $region11: #{tpu_custom_call.1} parent=1 // pred_check_branch
      %27 = sbr.rel (0) target = $region13
    $region12: #{tpu_custom_call.1} parent=1 // pred_region
      _
    $region13: #{tpu_custom_call.1} parent=1 // pred_fallthru
      _
    // Predicated region
    $region14: #{tpu_custom_call.1} parent=1 // pred_check
      _
    $region15: #{tpu_custom_call.1} parent=1 // pred_check_branch
      %29 = sbr.rel (0) target = $region17
    $region16: #{tpu_custom_call.1} parent=1 // pred_region
      _
    $region17: #{tpu_custom_call.1} parent=1 // pred_fallthru
      _
    // Predicated region
    $region18: #{tpu_custom_call.1} parent=1 // pred_check
      _
    $region19: #{tpu_custom_call.1} parent=1 // pred_check_branch
      %31 = sbr.rel (0) target = $region21
    $region20: #{tpu_custom_call.1} parent=1 // pred_region
      _
    $region21: #{tpu_custom_call.1} parent=1 // pred_fallthru
      _
    // Predicated region
    $region22: #{tpu_custom_call.1} parent=1 // pred_check
      _
    $region23: #{tpu_custom_call.1} parent=1 // pred_check_branch
      %33 = sbr.rel (0) target = $region25
    $region24: #{tpu_custom_call.1} parent=1 // pred_region
      %34 = dma.done [#allocation3], 1600
    $region25: #{tpu_custom_call.1} parent=1 // pred_fallthru
      _
    %v36 = vld [vmem:[%s0] sm:$0xff]
    %v37 = vld [vmem:[%s0 + $0x8] sm:$0xff]
    %v38 = vpack.c.bf16 %v36, %v36
    %v39 = vpack.c.bf16 %v37, %v37
    %v40 = vld [vmem:[#allocation2] sm:$0xf]
    %v41 = vld [vmem:[#allocation2 + $0x4] sm:$0xf]
    %v42 = vld [vmem:[#allocation2 + $0x8] sm:$0xf]
    %v43 = vld [vmem:[#allocation2 + $0xc] sm:$0xf]
    %v44 = vld [vmem:[#allocation2 + $0x10] sm:$0xf]
    %v45 = vld [vmem:[#allocation2 + $0x14] sm:$0xf]
    %v46 = vld [vmem:[#allocation2 + $0x18] sm:$0xf]
    %v47 = vld [vmem:[#allocation2 + $0x1c] sm:$0xf]
    %v48 = vld [vmem:[#allocation2 + $0x20] sm:$0xf]
    %v49 = vld [vmem:[#allocation2 + $0x24] sm:$0xf]
    %v50 = vld [vmem:[#allocation2 + $0x28] sm:$0xf]
    %v51 = vld [vmem:[#allocation2 + $0x2c] sm:$0xf]
    %v52 = vld [vmem:[#allocation2 + $0x30] sm:$0xf]
    %v53 = vld [vmem:[#allocation2 + $0x34] sm:$0xf]
    %v54 = vld [vmem:[#allocation2 + $0x38] sm:$0xf]
    %v55 = vld [vmem:[#allocation2 + $0x3c] sm:$0xf]
    %v56 = vld [vmem:[#allocation2 + $0x40] sm:$0xf]
    %v57 = vld [vmem:[#allocation2 + $0x44] sm:$0xf]
    %v58 = vld [vmem:[#allocation2 + $0x48] sm:$0xf]
    %v59 = vld [vmem:[#allocation2 + $0x4c] sm:$0xf]
    %v60 = vld [vmem:[#allocation2 + $0x50] sm:$0xf]
    %v61 = vld [vmem:[#allocation2 + $0x54] sm:$0xf]
    %v62 = vld [vmem:[#allocation2 + $0x58] sm:$0xf]
    %v63 = vld [vmem:[#allocation2 + $0x5c] sm:$0xf]
    %v64 = vld [vmem:[#allocation2 + $0x60] sm:$0x3]
    %v65 = vld [vmem:[%s2] sm:$0x1]
    %v67 = vlaneseq
    %v68 = vshrl.u32 %v67, 7
    %v69 = vsub.s32 0, %v68
    %v70 = vrot.slane %v65, %v69
    %v97 = vunpack.c.l.b16 %v40
    %v98 = vunpack.c.l.b16 %v41
    %v99 = vunpack.c.l.b16 %v42
    %v100 = vunpack.c.l.b16 %v43
    %v101 = vunpack.c.l.b16 %v44
    %v102 = vunpack.c.l.b16 %v45
    %v103 = vunpack.c.l.b16 %v46
    %v104 = vunpack.c.l.b16 %v47
    %v105 = vunpack.c.l.b16 %v48
    %v106 = vunpack.c.l.b16 %v49
    %v107 = vunpack.c.l.b16 %v50
    %v108 = vunpack.c.l.b16 %v51
    %v109 = vunpack.c.l.b16 %v52
    %v110 = vunpack.c.l.b16 %v53
    %v111 = vunpack.c.l.b16 %v54
    %v112 = vunpack.c.l.b16 %v55
    %v113 = vunpack.c.l.b16 %v56
    %v114 = vunpack.c.l.b16 %v57
    %v115 = vunpack.c.l.b16 %v58
    %v116 = vunpack.c.l.b16 %v59
    %v117 = vunpack.c.l.b16 %v60
    %v118 = vunpack.c.l.b16 %v61
    %v119 = vunpack.c.l.b16 %v62
    %v120 = vunpack.c.l.b16 %v63
    %v121 = vunpack.c.l.b16 %v64
    %v122 = vpack.c.b16 %v98, %v97
    %v123 = vpack.c.b16 %v100, %v99
    %v124 = vpack.c.b16 %v102, %v101
    %v125 = vpack.c.b16 %v104, %v103
    %v126 = vpack.c.b16 %v106, %v105
    %v127 = vpack.c.b16 %v108, %v107
    %v128 = vpack.c.b16 %v110, %v109
    %v129 = vpack.c.b16 %v112, %v111
    %v130 = vpack.c.b16 %v114, %v113
    %v131 = vpack.c.b16 %v116, %v115
    %v132 = vpack.c.b16 %v118, %v117
    %v133 = vpack.c.b16 %v120, %v119
    %v134 = vpack.c.b16 %v121, %v121
    %vm147 = vcmask 556032
    %v149 = vsel %vm147, %v39, 0
    %vm151 = vcmask 1041408
    %v153 = vsel %vm151, %v134, 0
    %155 = vmatprep.subr.bf16.mxu0 0
    %156 = vmatpush1.bf16.msra.mxu0 %v129
    %157 = vmatprep.subr.bf16.mxu0 0
    %158 = vmatpush1.bf16.msra.mxu0 %v128
    %159 = vmatprep.subr.bf16.mxu0 0
    %160 = vmatpush1.bf16.msra.mxu0 %v127
    %161 = vmatprep.subr.bf16.mxu0 0
    %162 = vmatpush1.bf16.msra.mxu0 %v126
    %163 = vmatprep.subr.bf16.mxu0 0
    %164 = vmatpush1.bf16.msra.mxu0 %v125
    %165 = vmatprep.subr.bf16.mxu0 0
    %166 = vmatpush1.bf16.msra.mxu0 %v124
    %167 = vmatprep.subr.bf16.mxu0 0
    %168 = vmatpush1.bf16.msra.mxu0 %v123
    %169 = vmatprep.subr.bf16.mxu0 0
    %170 = vmatpush1.bf16.msra.mxu0 %v122
    %171 = vmatprep.subr.bf16.mxu0 0
    %172 = vmatpush2.bf16.msra.mxu0 0
    %173 = vmatprep.subr.bf16.mxu0 0
    %174 = vmatpush2.bf16.msra.mxu0 0
    %175 = vmatprep.subr.bf16.mxu0 0
    %176 = vmatpush2.bf16.msra.mxu0 0
    %177 = vmatprep.subr.bf16.mxu0 0
    %178 = vmatpush2.bf16.msra.mxu0 %v153
    %179 = vmatprep.subr.bf16.mxu0 0
    %180 = vmatpush2.bf16.msra.mxu0 %v133
    %181 = vmatprep.subr.bf16.mxu0 0
    %182 = vmatpush2.bf16.msra.mxu0 %v132
    %183 = vmatprep.subr.bf16.mxu0 0
    %184 = vmatpush2.bf16.msra.mxu0 %v131
    %185 = vmatprep.subr.bf16.mxu0 0
    %186 = vmatpush2.bf16.msra.mxu0 %v130
    %187 = vmatprep.mubr.bf16.mxu0 %v149
    %188 = vmatmul.mubr.bf16.gmra.mxu0 %v38
    %v189 = vpop.f32.mrf.mxu0
    %v190 = vadd.f32 %v70, %v189
    %v191 = vpop.f32.mrf.mxu0
    %v192 = vpop.f32.mrf.mxu0
    %v193 = vpop.f32.mrf.mxu0
    %194 = vdwg.mxu0
    %v195 = vtanh.pop %v190
    %v196 = vpack.c.bf16 %v195, %v195
    %v197 = vld [vmem:[%s3] sm:$0xf]
    %v198 = vld [vmem:[%s3 + $0x4] sm:$0xf]
    %v199 = vld [vmem:[%s3 + $0x8] sm:$0xf]
    %v200 = vld [vmem:[%s3 + $0xc] sm:$0xf]
    %v201 = vld [vmem:[%s3 + $0x10] sm:$0xf]
    %v202 = vld [vmem:[%s3 + $0x14] sm:$0xf]
    %v203 = vld [vmem:[%s3 + $0x18] sm:$0xf]
    %v204 = vld [vmem:[%s3 + $0x1c] sm:$0xf]
    %v205 = vld [vmem:[%s3 + $0x20] sm:$0xf]
    %v206 = vld [vmem:[%s3 + $0x24] sm:$0xf]
    %v207 = vld [vmem:[%s3 + $0x28] sm:$0xf]
    %v208 = vld [vmem:[%s3 + $0x2c] sm:$0xf]
    %v209 = vld [vmem:[%s3 + $0x30] sm:$0xf]
    %v210 = vld [vmem:[%s3 + $0x34] sm:$0xf]
    %v211 = vld [vmem:[%s3 + $0x38] sm:$0xf]
    %v212 = vld [vmem:[%s3 + $0x3c] sm:$0xf]
    %v213 = vld [vmem:[%s4] sm:$0x1]
    %v215 = vlaneseq
    %v216 = vshrl.u32 %v215, 7
    %v217 = vsub.s32 0, %v216
    %v218 = vrot.slane %v213, %v217
    %v236 = vunpack.c.l.b16 %v197
    %v237 = vunpack.c.l.b16 %v198
    %v238 = vunpack.c.l.b16 %v199
    %v239 = vunpack.c.l.b16 %v200
    %v240 = vunpack.c.l.b16 %v201
    %v241 = vunpack.c.l.b16 %v202
    %v242 = vunpack.c.l.b16 %v203
    %v243 = vunpack.c.l.b16 %v204
    %v244 = vunpack.c.l.b16 %v205
    %v245 = vunpack.c.l.b16 %v206
    %v246 = vunpack.c.l.b16 %v207
    %v247 = vunpack.c.l.b16 %v208
    %v248 = vunpack.c.l.b16 %v209
    %v249 = vunpack.c.l.b16 %v210
    %v250 = vunpack.c.l.b16 %v211
    %v251 = vunpack.c.l.b16 %v212
    %v252 = vpack.c.b16 %v237, %v236
    %v253 = vpack.c.b16 %v239, %v238
    %v254 = vpack.c.b16 %v241, %v240
    %v255 = vpack.c.b16 %v243, %v242
    %v256 = vpack.c.b16 %v245, %v244
    %v257 = vpack.c.b16 %v247, %v246
    %v258 = vpack.c.b16 %v249, %v248
    %v259 = vpack.c.b16 %v251, %v250
    %268 = vmatprep.subr.bf16.mxu0 0
    %269 = vmatpush1.bf16.msra.mxu0 %v259
    %270 = vmatprep.subr.bf16.mxu0 0
    %271 = vmatpush1.bf16.msra.mxu0 %v258
    %272 = vmatprep.subr.bf16.mxu0 0
    %273 = vmatpush1.bf16.msra.mxu0 %v257
    %274 = vmatprep.subr.bf16.mxu0 0
    %275 = vmatpush1.bf16.msra.mxu0 %v256
    %276 = vmatprep.subr.bf16.mxu0 0
    %277 = vmatpush1.bf16.msra.mxu0 %v255
    %278 = vmatprep.subr.bf16.mxu0 0
    %279 = vmatpush1.bf16.msra.mxu0 %v254
    %280 = vmatprep.subr.bf16.mxu0 0
    %281 = vmatpush1.bf16.msra.mxu0 %v253
    %282 = vmatprep.subr.bf16.mxu0 0
    %283 = vmatpush1.bf16.msra.mxu0 %v252
    %284 = vmatprep.subr.bf16.mxu0 0
    %285 = vmatpush2.bf16.msra.mxu0 0
    %286 = vmatprep.subr.bf16.mxu0 0
    %287 = vmatpush2.bf16.msra.mxu0 0
    %288 = vmatprep.subr.bf16.mxu0 0
    %289 = vmatpush2.bf16.msra.mxu0 0
    %290 = vmatprep.subr.bf16.mxu0 0
    %291 = vmatpush2.bf16.msra.mxu0 0
    %292 = vmatprep.subr.bf16.mxu0 0
    %293 = vmatpush2.bf16.msra.mxu0 0
    %294 = vmatprep.subr.bf16.mxu0 0
    %295 = vmatpush2.bf16.msra.mxu0 0
    %296 = vmatprep.subr.bf16.mxu0 0
    %297 = vmatpush2.bf16.msra.mxu0 0
    %298 = vmatprep.subr.bf16.mxu0 0
    %299 = vmatpush2.bf16.msra.mxu0 0
    %300 = vmatprep.mubr.bf16.mxu0 0
    %301 = vmatmul.mubr.bf16.gmra.mxu0 %v196
    %v302 = vpop.f32.mrf.mxu0
    %v303 = vadd.f32 %v218, %v302
    %v304 = vpop.f32.mrf.mxu0
    %v305 = vpop.f32.mrf.mxu0
    %v306 = vpop.f32.mrf.mxu0
    %307 = vdwg.mxu0
    %vm308 = vcmask 130048
    %309 = vst.msk [vmem:[#allocation5] sm:$0xff] %vm308, %v303
    // Predicated region
    $region26: #{tpu_custom_call.1} parent=1 // pred_check
      _
    $region27: #{tpu_custom_call.1} parent=1 // pred_check_branch
      %311 = sbr.rel (0) target = $region29
    $region28: #{tpu_custom_call.1} parent=1 // pred_region
      %s313 = ssub.s32 128, 128
      %314 = vsyncadd [#allocation4], %s313
      %s316 = sshll.u32 [#allocation5], 4
      %s317 = int_to_ptr.vmem [resolvable:$true] %s316
      %319 = dma.vmem_to_hbm [thread:$0]  %s317, 128, %s5, [#allocation4]
    $region29: #{tpu_custom_call.1} parent=1 // pred_fallthru
      _
    // Predicated region
    $region30: #{tpu_custom_call.1} parent=1 // pred_check
      _
    $region31: #{tpu_custom_call.1} parent=1 // pred_check_branch
      %321 = sbr.rel (0) target = $region33
    $region32: #{tpu_custom_call.1} parent=1 // pred_region
      %322 = dma.done [#allocation4], 128
    $region33: #{tpu_custom_call.1} parent=1 // pred_fallthru
      _
    %323 = vsyncpa [#allocation3], 1
    %324 = vsyncpa [#allocation4], 1

</llo_original>
